<compile_context>
chip_gen: v7x
topology: tpu7x:2x2x1
jax: 0.10.0
libtpu: 0.0.40
codegen_flags: <defaults>
</compile_context>

<pallas_src>
import functools

import jax
import jax.numpy as jnp
import numpy as np
from jax.experimental import pallas as pl
from jax.experimental.pallas import tpu as pltpu

NUM_CLASSES = 20

# Deterministic class weights from CrossEntropyLoss2d.__init__ (enc == False branch).
_CLASS_WEIGHTS = np.array(
    [
        2.8149201869965, 6.9850029945374, 3.7890393733978, 9.9428062438965,
        9.7702074050903, 9.5110931396484, 10.311357498169, 10.026463508606,
        4.6323022842407, 9.5608062744141, 7.8698215484619, 9.5168733596802,
        10.373730659485, 6.6616044044495, 10.260489463806, 10.287888526917,
        10.289801597595, 10.405355453491, 10.138095855713, 0.0,
    ],
    dtype=np.float32,
)


def _round_up(x, m):
    return ((x + m - 1) // m) * m


def _ce2d_kernel(x_ref, t_ref, wt_ref, num_out_ref, den_out_ref,
                 num_acc, den_acc, *, rs):
    """One (C, R, 128) pixel-tile per grid step (fully independent grid steps).

    x_ref : (C, R, 128) logits (classes lead, pixels dense on sublane x lane)
    t_ref : (R, 128) int32 targets
    wt_ref: (R, 128) f32 per-pixel class weight (zero for padded / weight-0 pixels)
    outputs: (1, 1) partial numerator / denominator for this (batch, tile).
    """
    n_classes = x_ref.shape[0]
    n_rows = t_ref.shape[0]
    n_chunks = n_rows // rs

    num_acc[...] = jnp.zeros_like(num_acc)
    den_acc[...] = jnp.zeros_like(den_acc)

    @pl.loop(0, n_chunks)
    def _(j):
        r0 = pl.multiple_of(j * rs, rs)
        sl = pl.ds(r0, rs)

        t = t_ref[sl, :]                              # (rs, 128) int32
        wt = wt_ref[sl, :]                            # (rs, 128) f32

        # Pass 1: running max over classes + gather of the target logit,
        # as an unrolled elementwise loop over dense (rs, 128) slabs.
        x0 = x_ref[0, sl, :].astype(jnp.float32)
        m = x0
        x_t = x0                                      # correct when t == 0
        for c in range(1, n_classes):
            xc = x_ref[c, sl, :].astype(jnp.float32)
            m = jnp.maximum(m, xc)
            x_t = jnp.where(t == c, xc, x_t)

        # Pass 2: sum of exp(x - m) over classes (exp goes to the EUP slot).
        s = jnp.exp(x0 - m)
        for c in range(1, n_classes):
            s = s + jnp.exp(x_ref[c, sl, :].astype(jnp.float32) - m)

        logp_t = x_t - m - jnp.log(s)                 # (rs, 128)

        # wt == 0 for padded pixels and for zero-weight classes; the select
        # also protects against NaN/inf from out-of-bounds tail logits.
        num_acc[...] += jnp.where(wt > 0.0, wt * logp_t, 0.0)
        den_acc[...] += wt

    # Single cross-lane collapse per grid step.
    num_out_ref[...] = jnp.sum(num_acc[...], keepdims=True)
    den_out_ref[...] = jnp.sum(den_acc[...], keepdims=True)


@jax.jit
def cross_entropy_loss_2d(outputs, targets, weight):
    """outputs: (N, C, H, W) float (NCHW), targets: (N, H, W) int, weight: (C,).

    NLLLoss(weight, reduction='mean') applied to log_softmax(outputs, dim=1):
        loss = -sum_p weight[t_p] * log_softmax(x_p)[t_p] / sum_p weight[t_p]
    (NaN if every pixel has zero weight, matching PyTorch.)
    """
    N, C, H, W = outputs.shape
    hw = H * W

    # Densify the pixel axis: hw -> (rows, 128).
    hw128 = _round_up(hw, 128)
    rows = hw128 // 128

    logits = outputs.reshape(N, C, hw)
    if hw128 != hw:
        # TODO(synk): only hit when H*W % 128 != 0; this is the one remaining
        # full-tensor copy (minimal 128-lane tail pad).
        logits = jnp.pad(logits, ((0, 0), (0, 0), (0, hw128 - hw)))
    logits = logits.reshape(N, C, rows, 128)          # free reshape

    # Rows per grid tile: up to 256 (32768 pixels) to amortize per-step cost.
    R_MAX = 256
    R = rows if rows <= R_MAX else R_MAX
    n_tiles = -(-rows // R)                           # last logits block may
    rows_pad = n_tiles * R                            # overrun (masked by wt=0)

    # Inner row-chunk size (keeps live vregs small inside the class loop).
    if R % 32 == 0:
        rs = 32
    elif R % 8 == 0:
        rs = 8
    else:
        rs = R

    # Precompute per-pixel weight (tiny 20-entry gather) and zero-pad the tail.
    tgt = targets.reshape(N, hw).astype(jnp.int32)
    wt = weight.astype(jnp.float32)[tgt]              # (N, hw)
    pad = rows_pad * 128 - hw
    if pad:
        tgt = jnp.pad(tgt, ((0, 0), (0, pad)))
        wt = jnp.pad(wt, ((0, 0), (0, pad)))          # zeros => excluded pixels
    tgt = tgt.reshape(N, rows_pad, 128)
    wt = wt.reshape(N, rows_pad, 128)

    kernel = functools.partial(_ce2d_kernel, rs=rs)

    num_p, den_p = pl.pallas_call(
        kernel,
        out_shape=(
            jax.ShapeDtypeStruct((N, n_tiles, 1, 1), jnp.float32),
            jax.ShapeDtypeStruct((N, n_tiles, 1, 1), jnp.float32),
        ),
        grid_spec=pltpu.PrefetchScalarGridSpec(
            num_scalar_prefetch=0,
            grid=(N, n_tiles),
            in_specs=[
                # logits tile: (C, R, 128) — classes lead, pixels dense.
                pl.BlockSpec((pl.Squeezed(), C, R, 128),
                             lambda n, o: (n, 0, o, 0)),
                # targets tile: (R, 128) int32, dense.
                pl.BlockSpec((pl.Squeezed(), R, 128),
                             lambda n, o: (n, o, 0)),
                # per-pixel weight tile: (R, 128) f32, dense, zero-padded tail.
                pl.BlockSpec((pl.Squeezed(), R, 128),
                             lambda n, o: (n, o, 0)),
            ],
            out_specs=[
                # per-(batch, tile) partial numerator / denominator.
                pl.BlockSpec((pl.Squeezed(), pl.Squeezed(), 1, 1),
                             lambda n, o: (n, o, 0, 0)),
                pl.BlockSpec((pl.Squeezed(), pl.Squeezed(), 1, 1),
                             lambda n, o: (n, o, 0, 0)),
            ],
            scratch_shapes=[
                pltpu.VMEM((rs, 128), jnp.float32),   # per-lane numerator partials
                pltpu.VMEM((rs, 128), jnp.float32),   # per-lane denominator partials
            ],
        ),
        compiler_params=pltpu.CompilerParams(
            # Every grid step is independent -> both axes parallel
            # (keeps both v7x TensorCores busy even when N == 1).
            dimension_semantics=("parallel", "parallel"),
        ),
    )(logits, tgt, wt)

    return -(jnp.sum(num_p) / jnp.sum(den_p))


def _reference_loss(outputs, targets, weight):
    """Plain-JAX reference matching torch.nn.NLLLoss(weight)(log_softmax(x, dim=1), t)."""
    logp = jax.nn.log_softmax(outputs.astype(jnp.float32), axis=1)       # (N, C, H, W)
    t = targets.astype(jnp.int32)
    picked = jnp.take_along_axis(logp, t[:, None, :, :], axis=1)[:, 0]   # (N, H, W)
    w_t = weight[t]                                                      # (N, H, W)
    return -jnp.sum(w_t * picked) / jnp.sum(w_t)


if __name__ == "__main__":
    key = jax.random.PRNGKey(0)
    k1, k2 = jax.random.split(key)

    N, C, H, W = 2, NUM_CLASSES, 16, 16
    outputs = jax.random.normal(k1, (N, C, H, W), dtype=jnp.float32)
    targets = jax.random.randint(k2, (N, H, W), 0, C, dtype=jnp.int32)
    weight = jnp.asarray(_CLASS_WEIGHTS)

    loss = jax.block_until_ready(cross_entropy_loss_2d(outputs, targets, weight))
    ref = jax.block_until_ready(_reference_loss(outputs, targets, weight))
    np.testing.assert_allclose(np.asarray(loss), np.asarray(ref), rtol=1e-5, atol=1e-5)

    print("KERNEL_OK")
</pallas_src>

<mosaic_0001>
module attributes {stable_mosaic.version = 11 : i64} {
  func.func @_ce2d_kernel(%arg0: i32, %arg1: i32, %arg2: memref<1x20x2x128xf32, #tpu.memory_space<vmem>>, %arg3: memref<1x2x128xi32, #tpu.memory_space<vmem>>, %arg4: memref<1x2x128xf32, #tpu.memory_space<vmem>>, %arg5: memref<1x1x1x1xf32, #tpu.memory_space<vmem>>, %arg6: memref<1x1x1x1xf32, #tpu.memory_space<vmem>>, %arg7: memref<2x128xf32, #tpu.memory_space<vmem>>, %arg8: memref<2x128xf32, #tpu.memory_space<vmem>>) attributes {dimension_semantics = [#tpu.dimension_semantics<parallel>, #tpu.dimension_semantics<parallel>], iteration_bounds = array<i64: 2, 1>, scalar_prefetch = 0 : i64, scratch_operands = 2 : i64, tpu.core_type = #tpu.core_type<tc>, window_params = [{transform_indices = @transform_0, window_bounds = array<i64: 1, 20, 2, 128>}, {transform_indices = @transform_1, window_bounds = array<i64: 1, 2, 128>}, {transform_indices = @transform_2, window_bounds = array<i64: 1, 2, 128>}, {transform_indices = @transform_3, window_bounds = array<i64: 1, 1, 1, 1>}, {transform_indices = @transform_4, window_bounds = array<i64: 1, 1, 1, 1>}]} {
    %cst = arith.constant 0.000000e+00 : f32
    %0 = vector.broadcast %cst : f32 to vector<2x128xf32>
    %c0 = arith.constant 0 : index
    %c0_0 = arith.constant 0 : index
    %1 = vector.load %arg7[%c0, %c0_0] : memref<2x128xf32, #tpu.memory_space<vmem>>, vector<2x128xf32>
    tpu.vector_store %arg7[%c0, %c0_0], %0 {strides = array<i32>} : memref<2x128xf32, #tpu.memory_space<vmem>>, vector<2x128xf32>,
    %cst_1 = arith.constant 0.000000e+00 : f32
    %2 = vector.broadcast %cst_1 : f32 to vector<2x128xf32>
    %c0_2 = arith.constant 0 : index
    %c0_3 = arith.constant 0 : index
    %3 = vector.load %arg8[%c0_2, %c0_3] : memref<2x128xf32, #tpu.memory_space<vmem>>, vector<2x128xf32>
    tpu.vector_store %arg8[%c0_2, %c0_3], %2 {strides = array<i32>} : memref<2x128xf32, #tpu.memory_space<vmem>>, vector<2x128xf32>,
    %c0_i32 = arith.constant 0 : i32
    %c1_i32 = arith.constant 1 : i32
    %4 = arith.muli %c0_i32, %c1_i32 : i32
    %c0_i32_4 = arith.constant 0 : i32
    %5 = arith.addi %c0_i32_4, %4 : i32
    %c2_i32 = arith.constant 2 : i32
    %6 = arith.muli %5, %c2_i32 : i32
    %7 = tpu.assume_multiple %6, 2 : i32
    %c0_5 = arith.constant 0 : index
    %8 = arith.index_cast %7 : i32 to index
    %c0_6 = arith.constant 0 : index
    %9 = vector.load %arg3[%c0_5, %8, %c0_6] : memref<1x2x128xi32, #tpu.memory_space<vmem>>, vector<1x2x128xi32>
    %10 = vector.shape_cast %9 : vector<1x2x128xi32> to vector<2x128xi32>
    %c0_7 = arith.constant 0 : index
    %11 = arith.index_cast %7 : i32 to index
    %c0_8 = arith.constant 0 : index
    %12 = vector.load %arg4[%c0_7, %11, %c0_8] : memref<1x2x128xf32, #tpu.memory_space<vmem>>, vector<1x2x128xf32>
    %13 = vector.shape_cast %12 : vector<1x2x128xf32> to vector<2x128xf32>
    %c0_9 = arith.constant 0 : index
    %c0_10 = arith.constant 0 : index
    %14 = arith.index_cast %7 : i32 to index
    %c0_11 = arith.constant 0 : index
    %15 = vector.load %arg2[%c0_9, %c0_10, %14, %c0_11] : memref<1x20x2x128xf32, #tpu.memory_space<vmem>>, vector<1x1x2x128xf32>
    %16 = vector.shape_cast %15 : vector<1x1x2x128xf32> to vector<2x128xf32>
    %c0_12 = arith.constant 0 : index
    %c1 = arith.constant 1 : index
    %17 = arith.index_cast %7 : i32 to index
    %c0_13 = arith.constant 0 : index
    %18 = vector.load %arg2[%c0_12, %c1, %17, %c0_13] : memref<1x20x2x128xf32, #tpu.memory_space<vmem>>, vector<1x1x2x128xf32>
    %19 = vector.shape_cast %18 : vector<1x1x2x128xf32> to vector<2x128xf32>
    %20 = arith.maximumf %16, %19 : vector<2x128xf32>
    %c1_i32_14 = arith.constant 1 : i32
    %21 = vector.broadcast %c1_i32_14 : i32 to vector<2x128xi32>
    %22 = arith.cmpi eq, %10, %21 : vector<2x128xi32>
    %23 = arith.select %22, %19, %16 : vector<2x128xi1>, vector<2x128xf32>
    %c0_15 = arith.constant 0 : index
    %c2 = arith.constant 2 : index
    %24 = arith.index_cast %7 : i32 to index
    %c0_16 = arith.constant 0 : index
    %25 = vector.load %arg2[%c0_15, %c2, %24, %c0_16] : memref<1x20x2x128xf32, #tpu.memory_space<vmem>>, vector<1x1x2x128xf32>
    %26 = vector.shape_cast %25 : vector<1x1x2x128xf32> to vector<2x128xf32>
    %27 = arith.maximumf %20, %26 : vector<2x128xf32>
    %c2_i32_17 = arith.constant 2 : i32
    %28 = vector.broadcast %c2_i32_17 : i32 to vector<2x128xi32>
    %29 = arith.cmpi eq, %10, %28 : vector<2x128xi32>
    %30 = arith.select %29, %26, %23 : vector<2x128xi1>, vector<2x128xf32>
    %c0_18 = arith.constant 0 : index
    %c3 = arith.constant 3 : index
    %31 = arith.index_cast %7 : i32 to index
    %c0_19 = arith.constant 0 : index
    %32 = vector.load %arg2[%c0_18, %c3, %31, %c0_19] : memref<1x20x2x128xf32, #tpu.memory_space<vmem>>, vector<1x1x2x128xf32>
    %33 = vector.shape_cast %32 : vector<1x1x2x128xf32> to vector<2x128xf32>
    %34 = arith.maximumf %27, %33 : vector<2x128xf32>
    %c3_i32 = arith.constant 3 : i32
    %35 = vector.broadcast %c3_i32 : i32 to vector<2x128xi32>
    %36 = arith.cmpi eq, %10, %35 : vector<2x128xi32>
    %37 = arith.select %36, %33, %30 : vector<2x128xi1>, vector<2x128xf32>
    %c0_20 = arith.constant 0 : index
    %c4 = arith.constant 4 : index
    %38 = arith.index_cast %7 : i32 to index
    %c0_21 = arith.constant 0 : index
    %39 = vector.load %arg2[%c0_20, %c4, %38, %c0_21] : memref<1x20x2x128xf32, #tpu.memory_space<vmem>>, vector<1x1x2x128xf32>
    %40 = vector.shape_cast %39 : vector<1x1x2x128xf32> to vector<2x128xf32>
    %41 = arith.maximumf %34, %40 : vector<2x128xf32>
    %c4_i32 = arith.constant 4 : i32
    %42 = vector.broadcast %c4_i32 : i32 to vector<2x128xi32>
    %43 = arith.cmpi eq, %10, %42 : vector<2x128xi32>
    %44 = arith.select %43, %40, %37 : vector<2x128xi1>, vector<2x128xf32>
    %c0_22 = arith.constant 0 : index
    %c5 = arith.constant 5 : index
    %45 = arith.index_cast %7 : i32 to index
    %c0_23 = arith.constant 0 : index
    %46 = vector.load %arg2[%c0_22, %c5, %45, %c0_23] : memref<1x20x2x128xf32, #tpu.memory_space<vmem>>, vector<1x1x2x128xf32>
    %47 = vector.shape_cast %46 : vector<1x1x2x128xf32> to vector<2x128xf32>
    %48 = arith.maximumf %41, %47 : vector<2x128xf32>
    %c5_i32 = arith.constant 5 : i32
    %49 = vector.broadcast %c5_i32 : i32 to vector<2x128xi32>
    %50 = arith.cmpi eq, %10, %49 : vector<2x128xi32>
    %51 = arith.select %50, %47, %44 : vector<2x128xi1>, vector<2x128xf32>
    %c0_24 = arith.constant 0 : index
    %c6 = arith.constant 6 : index
    %52 = arith.index_cast %7 : i32 to index
    %c0_25 = arith.constant 0 : index
    %53 = vector.load %arg2[%c0_24, %c6, %52, %c0_25] : memref<1x20x2x128xf32, #tpu.memory_space<vmem>>, vector<1x1x2x128xf32>
    %54 = vector.shape_cast %53 : vector<1x1x2x128xf32> to vector<2x128xf32>
    %55 = arith.maximumf %48, %54 : vector<2x128xf32>
    %c6_i32 = arith.constant 6 : i32
    %56 = vector.broadcast %c6_i32 : i32 to vector<2x128xi32>
    %57 = arith.cmpi eq, %10, %56 : vector<2x128xi32>
    %58 = arith.select %57, %54, %51 : vector<2x128xi1>, vector<2x128xf32>
    %c0_26 = arith.constant 0 : index
    %c7 = arith.constant 7 : index
    %59 = arith.index_cast %7 : i32 to index
    %c0_27 = arith.constant 0 : index
    %60 = vector.load %arg2[%c0_26, %c7, %59, %c0_27] : memref<1x20x2x128xf32, #tpu.memory_space<vmem>>, vector<1x1x2x128xf32>
    %61 = vector.shape_cast %60 : vector<1x1x2x128xf32> to vector<2x128xf32>
    %62 = arith.maximumf %55, %61 : vector<2x128xf32>
    %c7_i32 = arith.constant 7 : i32
    %63 = vector.broadcast %c7_i32 : i32 to vector<2x128xi32>
    %64 = arith.cmpi eq, %10, %63 : vector<2x128xi32>
    %65 = arith.select %64, %61, %58 : vector<2x128xi1>, vector<2x128xf32>
    %c0_28 = arith.constant 0 : index
    %c8 = arith.constant 8 : index
    %66 = arith.index_cast %7 : i32 to index
    %c0_29 = arith.constant 0 : index
    %67 = vector.load %arg2[%c0_28, %c8, %66, %c0_29] : memref<1x20x2x128xf32, #tpu.memory_space<vmem>>, vector<1x1x2x128xf32>
    %68 = vector.shape_cast %67 : vector<1x1x2x128xf32> to vector<2x128xf32>
    %69 = arith.maximumf %62, %68 : vector<2x128xf32>
    %c8_i32 = arith.constant 8 : i32
    %70 = vector.broadcast %c8_i32 : i32 to vector<2x128xi32>
    %71 = arith.cmpi eq, %10, %70 : vector<2x128xi32>
    %72 = arith.select %71, %68, %65 : vector<2x128xi1>, vector<2x128xf32>
    %c0_30 = arith.constant 0 : index
    %c9 = arith.constant 9 : index
    %73 = arith.index_cast %7 : i32 to index
    %c0_31 = arith.constant 0 : index
    %74 = vector.load %arg2[%c0_30, %c9, %73, %c0_31] : memref<1x20x2x128xf32, #tpu.memory_space<vmem>>, vector<1x1x2x128xf32>
    %75 = vector.shape_cast %74 : vector<1x1x2x128xf32> to vector<2x128xf32>
    %76 = arith.maximumf %69, %75 : vector<2x128xf32>
    %c9_i32 = arith.constant 9 : i32
    %77 = vector.broadcast %c9_i32 : i32 to vector<2x128xi32>
    %78 = arith.cmpi eq, %10, %77 : vector<2x128xi32>
    %79 = arith.select %78, %75, %72 : vector<2x128xi1>, vector<2x128xf32>
    %c0_32 = arith.constant 0 : index
    %c10 = arith.constant 10 : index
    %80 = arith.index_cast %7 : i32 to index
    %c0_33 = arith.constant 0 : index
    %81 = vector.load %arg2[%c0_32, %c10, %80, %c0_33] : memref<1x20x2x128xf32, #tpu.memory_space<vmem>>, vector<1x1x2x128xf32>
    %82 = vector.shape_cast %81 : vector<1x1x2x128xf32> to vector<2x128xf32>
    %83 = arith.maximumf %76, %82 : vector<2x128xf32>
    %c10_i32 = arith.constant 10 : i32
    %84 = vector.broadcast %c10_i32 : i32 to vector<2x128xi32>
    %85 = arith.cmpi eq, %10, %84 : vector<2x128xi32>
    %86 = arith.select %85, %82, %79 : vector<2x128xi1>, vector<2x128xf32>
    %c0_34 = arith.constant 0 : index
    %c11 = arith.constant 11 : index
    %87 = arith.index_cast %7 : i32 to index
    %c0_35 = arith.constant 0 : index
    %88 = vector.load %arg2[%c0_34, %c11, %87, %c0_35] : memref<1x20x2x128xf32, #tpu.memory_space<vmem>>, vector<1x1x2x128xf32>
    %89 = vector.shape_cast %88 : vector<1x1x2x128xf32> to vector<2x128xf32>
    %90 = arith.maximumf %83, %89 : vector<2x128xf32>
    %c11_i32 = arith.constant 11 : i32
    %91 = vector.broadcast %c11_i32 : i32 to vector<2x128xi32>
    %92 = arith.cmpi eq, %10, %91 : vector<2x128xi32>
    %93 = arith.select %92, %89, %86 : vector<2x128xi1>, vector<2x128xf32>
    %c0_36 = arith.constant 0 : index
    %c12 = arith.constant 12 : index
    %94 = arith.index_cast %7 : i32 to index
    %c0_37 = arith.constant 0 : index
    %95 = vector.load %arg2[%c0_36, %c12, %94, %c0_37] : memref<1x20x2x128xf32, #tpu.memory_space<vmem>>, vector<1x1x2x128xf32>
    %96 = vector.shape_cast %95 : vector<1x1x2x128xf32> to vector<2x128xf32>
    %97 = arith.maximumf %90, %96 : vector<2x128xf32>
    %c12_i32 = arith.constant 12 : i32
    %98 = vector.broadcast %c12_i32 : i32 to vector<2x128xi32>
    %99 = arith.cmpi eq, %10, %98 : vector<2x128xi32>
    %100 = arith.select %99, %96, %93 : vector<2x128xi1>, vector<2x128xf32>
    %c0_38 = arith.constant 0 : index
    %c13 = arith.constant 13 : index
    %101 = arith.index_cast %7 : i32 to index
    %c0_39 = arith.constant 0 : index
    %102 = vector.load %arg2[%c0_38, %c13, %101, %c0_39] : memref<1x20x2x128xf32, #tpu.memory_space<vmem>>, vector<1x1x2x128xf32>
    %103 = vector.shape_cast %102 : vector<1x1x2x128xf32> to vector<2x128xf32>
    %104 = arith.maximumf %97, %103 : vector<2x128xf32>
    %c13_i32 = arith.constant 13 : i32
    %105 = vector.broadcast %c13_i32 : i32 to vector<2x128xi32>
    %106 = arith.cmpi eq, %10, %105 : vector<2x128xi32>
    %107 = arith.select %106, %103, %100 : vector<2x128xi1>, vector<2x128xf32>
    %c0_40 = arith.constant 0 : index
    %c14 = arith.constant 14 : index
    %108 = arith.index_cast %7 : i32 to index
    %c0_41 = arith.constant 0 : index
    %109 = vector.load %arg2[%c0_40, %c14, %108, %c0_41] : memref<1x20x2x128xf32, #tpu.memory_space<vmem>>, vector<1x1x2x128xf32>
    %110 = vector.shape_cast %109 : vector<1x1x2x128xf32> to vector<2x128xf32>
    %111 = arith.maximumf %104, %110 : vector<2x128xf32>
    %c14_i32 = arith.constant 14 : i32
    %112 = vector.broadcast %c14_i32 : i32 to vector<2x128xi32>
    %113 = arith.cmpi eq, %10, %112 : vector<2x128xi32>
    %114 = arith.select %113, %110, %107 : vector<2x128xi1>, vector<2x128xf32>
    %c0_42 = arith.constant 0 : index
    %c15 = arith.constant 15 : index
    %115 = arith.index_cast %7 : i32 to index
    %c0_43 = arith.constant 0 : index
    %116 = vector.load %arg2[%c0_42, %c15, %115, %c0_43] : memref<1x20x2x128xf32, #tpu.memory_space<vmem>>, vector<1x1x2x128xf32>
    %117 = vector.shape_cast %116 : vector<1x1x2x128xf32> to vector<2x128xf32>
    %118 = arith.maximumf %111, %117 : vector<2x128xf32>
    %c15_i32 = arith.constant 15 : i32
    %119 = vector.broadcast %c15_i32 : i32 to vector<2x128xi32>
    %120 = arith.cmpi eq, %10, %119 : vector<2x128xi32>
    %121 = arith.select %120, %117, %114 : vector<2x128xi1>, vector<2x128xf32>
    %c0_44 = arith.constant 0 : index
    %c16 = arith.constant 16 : index
    %122 = arith.index_cast %7 : i32 to index
    %c0_45 = arith.constant 0 : index
    %123 = vector.load %arg2[%c0_44, %c16, %122, %c0_45] : memref<1x20x2x128xf32, #tpu.memory_space<vmem>>, vector<1x1x2x128xf32>
    %124 = vector.shape_cast %123 : vector<1x1x2x128xf32> to vector<2x128xf32>
    %125 = arith.maximumf %118, %124 : vector<2x128xf32>
    %c16_i32 = arith.constant 16 : i32
    %126 = vector.broadcast %c16_i32 : i32 to vector<2x128xi32>
    %127 = arith.cmpi eq, %10, %126 : vector<2x128xi32>
    %128 = arith.select %127, %124, %121 : vector<2x128xi1>, vector<2x128xf32>
    %c0_46 = arith.constant 0 : index
    %c17 = arith.constant 17 : index
    %129 = arith.index_cast %7 : i32 to index
    %c0_47 = arith.constant 0 : index
    %130 = vector.load %arg2[%c0_46, %c17, %129, %c0_47] : memref<1x20x2x128xf32, #tpu.memory_space<vmem>>, vector<1x1x2x128xf32>
    %131 = vector.shape_cast %130 : vector<1x1x2x128xf32> to vector<2x128xf32>
    %132 = arith.maximumf %125, %131 : vector<2x128xf32>
    %c17_i32 = arith.constant 17 : i32
    %133 = vector.broadcast %c17_i32 : i32 to vector<2x128xi32>
    %134 = arith.cmpi eq, %10, %133 : vector<2x128xi32>
    %135 = arith.select %134, %131, %128 : vector<2x128xi1>, vector<2x128xf32>
    %c0_48 = arith.constant 0 : index
    %c18 = arith.constant 18 : index
    %136 = arith.index_cast %7 : i32 to index
    %c0_49 = arith.constant 0 : index
    %137 = vector.load %arg2[%c0_48, %c18, %136, %c0_49] : memref<1x20x2x128xf32, #tpu.memory_space<vmem>>, vector<1x1x2x128xf32>
    %138 = vector.shape_cast %137 : vector<1x1x2x128xf32> to vector<2x128xf32>
    %139 = arith.maximumf %132, %138 : vector<2x128xf32>
    %c18_i32 = arith.constant 18 : i32
    %140 = vector.broadcast %c18_i32 : i32 to vector<2x128xi32>
    %141 = arith.cmpi eq, %10, %140 : vector<2x128xi32>
    %142 = arith.select %141, %138, %135 : vector<2x128xi1>, vector<2x128xf32>
    %c0_50 = arith.constant 0 : index
    %c19 = arith.constant 19 : index
    %143 = arith.index_cast %7 : i32 to index
    %c0_51 = arith.constant 0 : index
    %144 = vector.load %arg2[%c0_50, %c19, %143, %c0_51] : memref<1x20x2x128xf32, #tpu.memory_space<vmem>>, vector<1x1x2x128xf32>
    %145 = vector.shape_cast %144 : vector<1x1x2x128xf32> to vector<2x128xf32>
    %146 = arith.maximumf %139, %145 : vector<2x128xf32>
    %c19_i32 = arith.constant 19 : i32
    %147 = vector.broadcast %c19_i32 : i32 to vector<2x128xi32>
    %148 = arith.cmpi eq, %10, %147 : vector<2x128xi32>
    %149 = arith.select %148, %145, %142 : vector<2x128xi1>, vector<2x128xf32>
    %150 = arith.subf %16, %146 : vector<2x128xf32>
    %151 = math.exp %150 : vector<2x128xf32>
    %c0_52 = arith.constant 0 : index
    %c1_53 = arith.constant 1 : index
    %152 = arith.index_cast %7 : i32 to index
    %c0_54 = arith.constant 0 : index
    %153 = vector.load %arg2[%c0_52, %c1_53, %152, %c0_54] : memref<1x20x2x128xf32, #tpu.memory_space<vmem>>, vector<1x1x2x128xf32>
    %154 = vector.shape_cast %153 : vector<1x1x2x128xf32> to vector<2x128xf32>
    %155 = arith.subf %154, %146 : vector<2x128xf32>
    %156 = math.exp %155 : vector<2x128xf32>
    %157 = arith.addf %151, %156 : vector<2x128xf32>
    %c0_55 = arith.constant 0 : index
    %c2_56 = arith.constant 2 : index
    %158 = arith.index_cast %7 : i32 to index
    %c0_57 = arith.constant 0 : index
    %159 = vector.load %arg2[%c0_55, %c2_56, %158, %c0_57] : memref<1x20x2x128xf32, #tpu.memory_space<vmem>>, vector<1x1x2x128xf32>
    %160 = vector.shape_cast %159 : vector<1x1x2x128xf32> to vector<2x128xf32>
    %161 = arith.subf %160, %146 : vector<2x128xf32>
    %162 = math.exp %161 : vector<2x128xf32>
    %163 = arith.addf %157, %162 : vector<2x128xf32>
    %c0_58 = arith.constant 0 : index
    %c3_59 = arith.constant 3 : index
    %164 = arith.index_cast %7 : i32 to index
    %c0_60 = arith.constant 0 : index
    %165 = vector.load %arg2[%c0_58, %c3_59, %164, %c0_60] : memref<1x20x2x128xf32, #tpu.memory_space<vmem>>, vector<1x1x2x128xf32>
    %166 = vector.shape_cast %165 : vector<1x1x2x128xf32> to vector<2x128xf32>
    %167 = arith.subf %166, %146 : vector<2x128xf32>
    %168 = math.exp %167 : vector<2x128xf32>
    %169 = arith.addf %163, %168 : vector<2x128xf32>
    %c0_61 = arith.constant 0 : index
    %c4_62 = arith.constant 4 : index
    %170 = arith.index_cast %7 : i32 to index
    %c0_63 = arith.constant 0 : index
    %171 = vector.load %arg2[%c0_61, %c4_62, %170, %c0_63] : memref<1x20x2x128xf32, #tpu.memory_space<vmem>>, vector<1x1x2x128xf32>
    %172 = vector.shape_cast %171 : vector<1x1x2x128xf32> to vector<2x128xf32>
    %173 = arith.subf %172, %146 : vector<2x128xf32>
    %174 = math.exp %173 : vector<2x128xf32>
    %175 = arith.addf %169, %174 : vector<2x128xf32>
    %c0_64 = arith.constant 0 : index
    %c5_65 = arith.constant 5 : index
    %176 = arith.index_cast %7 : i32 to index
    %c0_66 = arith.constant 0 : index
    %177 = vector.load %arg2[%c0_64, %c5_65, %176, %c0_66] : memref<1x20x2x128xf32, #tpu.memory_space<vmem>>, vector<1x1x2x128xf32>
    %178 = vector.shape_cast %177 : vector<1x1x2x128xf32> to vector<2x128xf32>
    %179 = arith.subf %178, %146 : vector<2x128xf32>
    %180 = math.exp %179 : vector<2x128xf32>
    %181 = arith.addf %175, %180 : vector<2x128xf32>
    %c0_67 = arith.constant 0 : index
    %c6_68 = arith.constant 6 : index
    %182 = arith.index_cast %7 : i32 to index
    %c0_69 = arith.constant 0 : index
    %183 = vector.load %arg2[%c0_67, %c6_68, %182, %c0_69] : memref<1x20x2x128xf32, #tpu.memory_space<vmem>>, vector<1x1x2x128xf32>
    %184 = vector.shape_cast %183 : vector<1x1x2x128xf32> to vector<2x128xf32>
    %185 = arith.subf %184, %146 : vector<2x128xf32>
    %186 = math.exp %185 : vector<2x128xf32>
    %187 = arith.addf %181, %186 : vector<2x128xf32>
    %c0_70 = arith.constant 0 : index
    %c7_71 = arith.constant 7 : index
    %188 = arith.index_cast %7 : i32 to index
    %c0_72 = arith.constant 0 : index
    %189 = vector.load %arg2[%c0_70, %c7_71, %188, %c0_72] : memref<1x20x2x128xf32, #tpu.memory_space<vmem>>, vector<1x1x2x128xf32>
    %190 = vector.shape_cast %189 : vector<1x1x2x128xf32> to vector<2x128xf32>
    %191 = arith.subf %190, %146 : vector<2x128xf32>
    %192 = math.exp %191 : vector<2x128xf32>
    %193 = arith.addf %187, %192 : vector<2x128xf32>
    %c0_73 = arith.constant 0 : index
    %c8_74 = arith.constant 8 : index
    %194 = arith.index_cast %7 : i32 to index
    %c0_75 = arith.constant 0 : index
    %195 = vector.load %arg2[%c0_73, %c8_74, %194, %c0_75] : memref<1x20x2x128xf32, #tpu.memory_space<vmem>>, vector<1x1x2x128xf32>
    %196 = vector.shape_cast %195 : vector<1x1x2x128xf32> to vector<2x128xf32>
    %197 = arith.subf %196, %146 : vector<2x128xf32>
    %198 = math.exp %197 : vector<2x128xf32>
    %199 = arith.addf %193, %198 : vector<2x128xf32>
    %c0_76 = arith.constant 0 : index
    %c9_77 = arith.constant 9 : index
    %200 = arith.index_cast %7 : i32 to index
    %c0_78 = arith.constant 0 : index
    %201 = vector.load %arg2[%c0_76, %c9_77, %200, %c0_78] : memref<1x20x2x128xf32, #tpu.memory_space<vmem>>, vector<1x1x2x128xf32>
    %202 = vector.shape_cast %201 : vector<1x1x2x128xf32> to vector<2x128xf32>
    %203 = arith.subf %202, %146 : vector<2x128xf32>
    %204 = math.exp %203 : vector<2x128xf32>
    %205 = arith.addf %199, %204 : vector<2x128xf32>
    %c0_79 = arith.constant 0 : index
    %c10_80 = arith.constant 10 : index
    %206 = arith.index_cast %7 : i32 to index
    %c0_81 = arith.constant 0 : index
    %207 = vector.load %arg2[%c0_79, %c10_80, %206, %c0_81] : memref<1x20x2x128xf32, #tpu.memory_space<vmem>>, vector<1x1x2x128xf32>
    %208 = vector.shape_cast %207 : vector<1x1x2x128xf32> to vector<2x128xf32>
    %209 = arith.subf %208, %146 : vector<2x128xf32>
    %210 = math.exp %209 : vector<2x128xf32>
    %211 = arith.addf %205, %210 : vector<2x128xf32>
    %c0_82 = arith.constant 0 : index
    %c11_83 = arith.constant 11 : index
    %212 = arith.index_cast %7 : i32 to index
    %c0_84 = arith.constant 0 : index
    %213 = vector.load %arg2[%c0_82, %c11_83, %212, %c0_84] : memref<1x20x2x128xf32, #tpu.memory_space<vmem>>, vector<1x1x2x128xf32>
    %214 = vector.shape_cast %213 : vector<1x1x2x128xf32> to vector<2x128xf32>
    %215 = arith.subf %214, %146 : vector<2x128xf32>
    %216 = math.exp %215 : vector<2x128xf32>
    %217 = arith.addf %211, %216 : vector<2x128xf32>
    %c0_85 = arith.constant 0 : index
    %c12_86 = arith.constant 12 : index
    %218 = arith.index_cast %7 : i32 to index
    %c0_87 = arith.constant 0 : index
    %219 = vector.load %arg2[%c0_85, %c12_86, %218, %c0_87] : memref<1x20x2x128xf32, #tpu.memory_space<vmem>>, vector<1x1x2x128xf32>
    %220 = vector.shape_cast %219 : vector<1x1x2x128xf32> to vector<2x128xf32>
    %221 = arith.subf %220, %146 : vector<2x128xf32>
    %222 = math.exp %221 : vector<2x128xf32>
    %223 = arith.addf %217, %222 : vector<2x128xf32>
    %c0_88 = arith.constant 0 : index
    %c13_89 = arith.constant 13 : index
    %224 = arith.index_cast %7 : i32 to index
    %c0_90 = arith.constant 0 : index
    %225 = vector.load %arg2[%c0_88, %c13_89, %224, %c0_90] : memref<1x20x2x128xf32, #tpu.memory_space<vmem>>, vector<1x1x2x128xf32>
    %226 = vector.shape_cast %225 : vector<1x1x2x128xf32> to vector<2x128xf32>
    %227 = arith.subf %226, %146 : vector<2x128xf32>
    %228 = math.exp %227 : vector<2x128xf32>
    %229 = arith.addf %223, %228 : vector<2x128xf32>
    %c0_91 = arith.constant 0 : index
    %c14_92 = arith.constant 14 : index
    %230 = arith.index_cast %7 : i32 to index
    %c0_93 = arith.constant 0 : index
    %231 = vector.load %arg2[%c0_91, %c14_92, %230, %c0_93] : memref<1x20x2x128xf32, #tpu.memory_space<vmem>>, vector<1x1x2x128xf32>
    %232 = vector.shape_cast %231 : vector<1x1x2x128xf32> to vector<2x128xf32>
    %233 = arith.subf %232, %146 : vector<2x128xf32>
    %234 = math.exp %233 : vector<2x128xf32>
    %235 = arith.addf %229, %234 : vector<2x128xf32>
    %c0_94 = arith.constant 0 : index
    %c15_95 = arith.constant 15 : index
    %236 = arith.index_cast %7 : i32 to index
    %c0_96 = arith.constant 0 : index
    %237 = vector.load %arg2[%c0_94, %c15_95, %236, %c0_96] : memref<1x20x2x128xf32, #tpu.memory_space<vmem>>, vector<1x1x2x128xf32>
    %238 = vector.shape_cast %237 : vector<1x1x2x128xf32> to vector<2x128xf32>
    %239 = arith.subf %238, %146 : vector<2x128xf32>
    %240 = math.exp %239 : vector<2x128xf32>
    %241 = arith.addf %235, %240 : vector<2x128xf32>
    %c0_97 = arith.constant 0 : index
    %c16_98 = arith.constant 16 : index
    %242 = arith.index_cast %7 : i32 to index
    %c0_99 = arith.constant 0 : index
    %243 = vector.load %arg2[%c0_97, %c16_98, %242, %c0_99] : memref<1x20x2x128xf32, #tpu.memory_space<vmem>>, vector<1x1x2x128xf32>
    %244 = vector.shape_cast %243 : vector<1x1x2x128xf32> to vector<2x128xf32>
    %245 = arith.subf %244, %146 : vector<2x128xf32>
    %246 = math.exp %245 : vector<2x128xf32>
    %247 = arith.addf %241, %246 : vector<2x128xf32>
    %c0_100 = arith.constant 0 : index
    %c17_101 = arith.constant 17 : index
    %248 = arith.index_cast %7 : i32 to index
    %c0_102 = arith.constant 0 : index
    %249 = vector.load %arg2[%c0_100, %c17_101, %248, %c0_102] : memref<1x20x2x128xf32, #tpu.memory_space<vmem>>, vector<1x1x2x128xf32>
    %250 = vector.shape_cast %249 : vector<1x1x2x128xf32> to vector<2x128xf32>
    %251 = arith.subf %250, %146 : vector<2x128xf32>
    %252 = math.exp %251 : vector<2x128xf32>
    %253 = arith.addf %247, %252 : vector<2x128xf32>
    %c0_103 = arith.constant 0 : index
    %c18_104 = arith.constant 18 : index
    %254 = arith.index_cast %7 : i32 to index
    %c0_105 = arith.constant 0 : index
    %255 = vector.load %arg2[%c0_103, %c18_104, %254, %c0_105] : memref<1x20x2x128xf32, #tpu.memory_space<vmem>>, vector<1x1x2x128xf32>
    %256 = vector.shape_cast %255 : vector<1x1x2x128xf32> to vector<2x128xf32>
    %257 = arith.subf %256, %146 : vector<2x128xf32>
    %258 = math.exp %257 : vector<2x128xf32>
    %259 = arith.addf %253, %258 : vector<2x128xf32>
    %c0_106 = arith.constant 0 : index
    %c19_107 = arith.constant 19 : index
    %260 = arith.index_cast %7 : i32 to index
    %c0_108 = arith.constant 0 : index
    %261 = vector.load %arg2[%c0_106, %c19_107, %260, %c0_108] : memref<1x20x2x128xf32, #tpu.memory_space<vmem>>, vector<1x1x2x128xf32>
    %262 = vector.shape_cast %261 : vector<1x1x2x128xf32> to vector<2x128xf32>
    %263 = arith.subf %262, %146 : vector<2x128xf32>
    %264 = math.exp %263 : vector<2x128xf32>
    %265 = arith.addf %259, %264 : vector<2x128xf32>
    %266 = arith.subf %149, %146 : vector<2x128xf32>
    %267 = math.log %265 : vector<2x128xf32>
    %268 = arith.subf %266, %267 : vector<2x128xf32>
    %c0_109 = arith.constant 0 : index
    %c0_110 = arith.constant 0 : index
    %269 = vector.load %arg7[%c0_109, %c0_110] : memref<2x128xf32, #tpu.memory_space<vmem>>, vector<2x128xf32>
    %cst_111 = arith.constant 0.000000e+00 : f32
    %270 = vector.broadcast %cst_111 : f32 to vector<2x128xf32>
    %271 = arith.cmpf ogt, %13, %270 : vector<2x128xf32>
    %272 = arith.mulf %13, %268 : vector<2x128xf32>
    %cst_112 = arith.constant 0.000000e+00 : f32
    %273 = vector.broadcast %cst_112 : f32 to vector<2x128xf32>
    %274 = arith.select %271, %272, %273 : vector<2x128xi1>, vector<2x128xf32>
    %275 = arith.addf %269, %274 : vector<2x128xf32>
    %c0_113 = arith.constant 0 : index
    %c0_114 = arith.constant 0 : index
    %276 = vector.load %arg7[%c0_113, %c0_114] : memref<2x128xf32, #tpu.memory_space<vmem>>, vector<2x128xf32>
    tpu.vector_store %arg7[%c0_113, %c0_114], %275 {strides = array<i32>} : memref<2x128xf32, #tpu.memory_space<vmem>>, vector<2x128xf32>,
    %c0_115 = arith.constant 0 : index
    %c0_116 = arith.constant 0 : index
    %277 = vector.load %arg8[%c0_115, %c0_116] : memref<2x128xf32, #tpu.memory_space<vmem>>, vector<2x128xf32>
    %278 = arith.addf %277, %13 : vector<2x128xf32>
    %c0_117 = arith.constant 0 : index
    %c0_118 = arith.constant 0 : index
    %279 = vector.load %arg8[%c0_117, %c0_118] : memref<2x128xf32, #tpu.memory_space<vmem>>, vector<2x128xf32>
    tpu.vector_store %arg8[%c0_117, %c0_118], %278 {strides = array<i32>} : memref<2x128xf32, #tpu.memory_space<vmem>>, vector<2x128xf32>,
    %c1_i32_119 = arith.constant 1 : i32
    %c0_120 = arith.constant 0 : index
    %c0_121 = arith.constant 0 : index
    %280 = vector.load %arg7[%c0_120, %c0_121] : memref<2x128xf32, #tpu.memory_space<vmem>>, vector<2x128xf32>
    %281 = vector.shape_cast %280 : vector<2x128xf32> to vector<1x2x128xf32>
    %cst_122 = arith.constant dense<0.000000e+00> : vector<1xf32>
    %282 = vector.multi_reduction <add>, %281, %cst_122 [1, 2] : vector<1x2x128xf32> to vector<1xf32>
    %283 = vector.shape_cast %282 : vector<1xf32> to vector<1x1x1xf32>
    %284 = vector.extract %283[0, 0, 0] : f32 from vector<1x1x1xf32>
    %285 = vector.broadcast %284 : f32 to vector<1x1xf32>
    %c0_123 = arith.constant 0 : index
    %c0_124 = arith.constant 0 : index
    %c0_125 = arith.constant 0 : index
    %c0_126 = arith.constant 0 : index
    %286 = vector.load %arg5[%c0_123, %c0_124, %c0_125, %c0_126] : memref<1x1x1x1xf32, #tpu.memory_space<vmem>>, vector<1x1x1x1xf32>
    %287 = vector.shape_cast %286 : vector<1x1x1x1xf32> to vector<1x1xf32>
    %288 = vector.shape_cast %285 : vector<1x1xf32> to vector<1x1x1x1xf32>
    tpu.vector_store %arg5[%c0_123, %c0_124, %c0_125, %c0_126], %288 {strides = array<i32>} : memref<1x1x1x1xf32, #tpu.memory_space<vmem>>, vector<1x1x1x1xf32>,
    %c0_127 = arith.constant 0 : index
    %c0_128 = arith.constant 0 : index
    %289 = vector.load %arg8[%c0_127, %c0_128] : memref<2x128xf32, #tpu.memory_space<vmem>>, vector<2x128xf32>
    %290 = vector.shape_cast %289 : vector<2x128xf32> to vector<1x2x128xf32>
    %cst_129 = arith.constant dense<0.000000e+00> : vector<1xf32>
    %291 = vector.multi_reduction <add>, %290, %cst_129 [1, 2] : vector<1x2x128xf32> to vector<1xf32>
    %292 = vector.shape_cast %291 : vector<1xf32> to vector<1x1x1xf32>
    %293 = vector.extract %292[0, 0, 0] : f32 from vector<1x1x1xf32>
    %294 = vector.broadcast %293 : f32 to vector<1x1xf32>
    %c0_130 = arith.constant 0 : index
    %c0_131 = arith.constant 0 : index
    %c0_132 = arith.constant 0 : index
    %c0_133 = arith.constant 0 : index
    %295 = vector.load %arg6[%c0_130, %c0_131, %c0_132, %c0_133] : memref<1x1x1x1xf32, #tpu.memory_space<vmem>>, vector<1x1x1x1xf32>
    %296 = vector.shape_cast %295 : vector<1x1x1x1xf32> to vector<1x1xf32>
    %297 = vector.shape_cast %294 : vector<1x1xf32> to vector<1x1x1x1xf32>
    tpu.vector_store %arg6[%c0_130, %c0_131, %c0_132, %c0_133], %297 {strides = array<i32>} : memref<1x1x1x1xf32, #tpu.memory_space<vmem>>, vector<1x1x1x1xf32>,
    return
  }
  func.func @transform_0(%arg0: i32, %arg1: i32) -> (i32, i32, i32, i32) {
    %c0_i32 = arith.constant 0 : i32
    %c0_i32_0 = arith.constant 0 : i32
    %c0_i32_1 = arith.constant 0 : i32
    return %arg0, %c0_i32, %arg1, %c0_i32_0 : i32, i32, i32, i32
  }
  func.func @transform_1(%arg0: i32, %arg1: i32) -> (i32, i32, i32) {
    %c0_i32 = arith.constant 0 : i32
    %c0_i32_0 = arith.constant 0 : i32
    return %arg0, %arg1, %c0_i32 : i32, i32, i32
  }
  func.func @transform_2(%arg0: i32, %arg1: i32) -> (i32, i32, i32) {
    %c0_i32 = arith.constant 0 : i32
    %c0_i32_0 = arith.constant 0 : i32
    return %arg0, %arg1, %c0_i32 : i32, i32, i32
  }
  func.func @transform_3(%arg0: i32, %arg1: i32) -> (i32, i32, i32, i32) {
    %c0_i32 = arith.constant 0 : i32
    %c0_i32_0 = arith.constant 0 : i32
    %c0_i32_1 = arith.constant 0 : i32
    return %arg0, %arg1, %c0_i32, %c0_i32_0 : i32, i32, i32, i32
  }
  func.func @transform_4(%arg0: i32, %arg1: i32) -> (i32, i32, i32, i32) {
    %c0_i32 = arith.constant 0 : i32
    %c0_i32_0 = arith.constant 0 : i32
    %c0_i32_1 = arith.constant 0 : i32
    return %arg0, %arg1, %c0_i32, %c0_i32_0 : i32, i32, i32, i32
  }
}

</mosaic_0001>

<llo_original>
// kernel: cross_entropy_loss_2d.1
$region0: #{cross_entropy_loss_2d.1}
  #allocation0 [shape = 'u32[]', space=smem, size = 0x4, offset = 0x4, fixed_abs, tag = 'smem constant byte address 0x4 - core index']
  #allocation1 [shape = 'u32[144,128]{1,0:T(1,128)}', space=vmem, size = 0x12000, scoped, tag = 'internal scratch']
  #allocation2 [shape = 'f32[2,128]{1,0:T(2,128)}', space=vmem, size = 0x400, scoped, tag = 'scratch operand']
  #allocation3 [shape = 'f32[2,128]{1,0:T(2,128)}', space=vmem, size = 0x400, scoped, tag = 'scratch operand']
  %s0 = inlined_call_operand.vmem [shape: f32[2,20,2,128], index: 0, kind: input, shape index: {}]
  %s1 = inlined_call_operand.vmem [shape: s32[2,2,128], index: 1, kind: input, shape index: {}]
  %s2 = inlined_call_operand.vmem [shape: f32[2,2,128], index: 2, kind: input, shape index: {}]
  %s3 = inlined_call_operand.vmem [shape: f32[2,1,1,1], index: 3, kind: output, shape index: {0}]
  %s4 = inlined_call_operand.vmem [shape: f32[2,1,1,1], index: 4, kind: output, shape index: {1}]
  %5 = xla_tuple %s3, %s4
  %s6 = sld [smem:[#allocation0]]
  $region53: #{cross_entropy_loss_2d.1} parent=0
    _
  %s8 = ssub.s32 1, %s6
  %s9 = scalar_select 0, %s8, %s6
  loop: start=0, step=1, limit=4
  $region2: #{cross_entropy_loss_2d.1} parent=0 // loop_pre_header
    _
  $region3: #{cross_entropy_loss_2d.1} parent=0 // loop_header
    %s11 = sphi 0, %s15
    %p12 = scmp.ge.s32.totalorder %s11, 4
    %s18 = sphi 0, %s30
    %s19 = sphi 0, %s26
    %s20 = sphi 0, %s18
    %s21 = sphi 0, %s19
    %s22 = sphi 0, %s20
    %s23 = sphi 0, %s21
    %s35 = sphi 0, %s37
    %s38 = sphi 0, %s35
    %s39 = sphi 0, %s38
    %s55 = sphi 0, %s39
    %s63 = sphi 0, %s65
    %s66 = sphi 0, %s63
    %s67 = sphi 0, %s66
    %s83 = sphi 0, %s67
    %s91 = sphi 0, %s93
    %s94 = sphi 0, %s91
    %s95 = sphi 0, %s94
    %s111 = sphi 0, %s95
    %s119 = sphi 0, %s121
    %s122 = sphi 0, %s119
    %s123 = sphi 0, %s122
    %s139 = sphi 0, %s123
    %s147 = sphi 0, %s149
    %s150 = sphi 0, %s147
    %s151 = sphi 0, %s150
    %s167 = sphi 0, %s151
  $region4: #{cross_entropy_loss_2d.1} parent=0 // loop_header_branch
    %14 = sbr.rel (%p12) target = $region8
  $region5: #{cross_entropy_loss_2d.1} parent=0 // loop_body
    %s16 = ssub.s32 %s11, 1
    %s17 = ssub.s32 %s11, 2
    %s24 = sadd.s32 1, %s19
    %p25 = scmp.ge.s32.totalorder %s24, 1
    %s26 = scalar_select %p25, 0, %s24
    %s27 = sadd.s32 1, %s18
    %s28 = scalar_select %p25, %s27, %s18
    %p29 = scmp.ge.s32.totalorder %s28, 2
    %s30 = scalar_select %p29, 0, %s28
    %s31 = ssub.s32 %s18, %s30
    %s32 = ssub.s32 %s19, %s26
    %s33 = sor.u32 %s31, %s32
    %p34 = scmp.eq.s32.totalorder %s33, 0
    %s36 = sadd.s32 %s35, 1
    %s37 = scalar_select %p34, %s35, %s36
    %p40 = pneg %p34
    %p41 = scmp.eq.s32.totalorder %s11, 1
    %p42 = por %p40, %p41
    %p43 = scmp.ne.s32.totalorder %s35, %s38
    %p44 = scmp.eq.s32.totalorder %s11, 0
    %p45 = por %p43, %p44
    %p46 = scmp.ne.s32.totalorder %s35, %s38
    %p47 = scmp.eq.s32.totalorder %s16, 1
    %p48 = por %p46, %p47
    %p49 = scmp.ne.s32.totalorder %s38, %s39
    %p50 = scmp.eq.s32.totalorder %s16, 0
    %p51 = por %p49, %p50
    %p52 = scmp.ne.s32.totalorder %s38, %s39
    %p53 = scmp.eq.s32.totalorder %s17, 1
    %p54 = por %p52, %p53
    %p56 = scmp.ne.s32.totalorder %s39, %s55
    %p57 = scmp.eq.s32.totalorder %s17, 0
    %p58 = por %p56, %p57
    %s59 = ssub.s32 %s18, %s30
    %s60 = ssub.s32 %s19, %s26
    %s61 = sor.u32 %s59, %s60
    %p62 = scmp.eq.s32.totalorder %s61, 0
    %s64 = sadd.s32 %s63, 1
    %s65 = scalar_select %p62, %s63, %s64
    %p68 = pneg %p62
    %p69 = scmp.eq.s32.totalorder %s11, 1
    %p70 = por %p68, %p69
    %p71 = scmp.ne.s32.totalorder %s63, %s66
    %p72 = scmp.eq.s32.totalorder %s11, 0
    %p73 = por %p71, %p72
    %p74 = scmp.ne.s32.totalorder %s63, %s66
    %p75 = scmp.eq.s32.totalorder %s16, 1
    %p76 = por %p74, %p75
    %p77 = scmp.ne.s32.totalorder %s66, %s67
    %p78 = scmp.eq.s32.totalorder %s16, 0
    %p79 = por %p77, %p78
    %p80 = scmp.ne.s32.totalorder %s66, %s67
    %p81 = scmp.eq.s32.totalorder %s17, 1
    %p82 = por %p80, %p81
    %p84 = scmp.ne.s32.totalorder %s67, %s83
    %p85 = scmp.eq.s32.totalorder %s17, 0
    %p86 = por %p84, %p85
    %s87 = ssub.s32 %s18, %s30
    %s88 = ssub.s32 %s19, %s26
    %s89 = sor.u32 %s87, %s88
    %p90 = scmp.eq.s32.totalorder %s89, 0
    %s92 = sadd.s32 %s91, 1
    %s93 = scalar_select %p90, %s91, %s92
    %p96 = pneg %p90
    %p97 = scmp.eq.s32.totalorder %s11, 1
    %p98 = por %p96, %p97
    %p99 = scmp.ne.s32.totalorder %s91, %s94
    %p100 = scmp.eq.s32.totalorder %s11, 0
    %p101 = por %p99, %p100
    %p102 = scmp.ne.s32.totalorder %s91, %s94
    %p103 = scmp.eq.s32.totalorder %s16, 1
    %p104 = por %p102, %p103
    %p105 = scmp.ne.s32.totalorder %s94, %s95
    %p106 = scmp.eq.s32.totalorder %s16, 0
    %p107 = por %p105, %p106
    %p108 = scmp.ne.s32.totalorder %s94, %s95
    %p109 = scmp.eq.s32.totalorder %s17, 1
    %p110 = por %p108, %p109
    %p112 = scmp.ne.s32.totalorder %s95, %s111
    %p113 = scmp.eq.s32.totalorder %s17, 0
    %p114 = por %p112, %p113
    %s115 = ssub.s32 %s18, %s30
    %s116 = ssub.s32 %s19, %s26
    %s117 = sor.u32 %s115, %s116
    %p118 = scmp.eq.s32.totalorder %s117, 0
    %s120 = sadd.s32 %s119, 1
    %s121 = scalar_select %p118, %s119, %s120
    %p124 = pneg %p118
    %p125 = scmp.eq.s32.totalorder %s11, 1
    %p126 = por %p124, %p125
    %p127 = scmp.ne.s32.totalorder %s119, %s122
    %p128 = scmp.eq.s32.totalorder %s11, 0
    %p129 = por %p127, %p128
    %p130 = scmp.ne.s32.totalorder %s119, %s122
    %p131 = scmp.eq.s32.totalorder %s16, 1
    %p132 = por %p130, %p131
    %p133 = scmp.ne.s32.totalorder %s122, %s123
    %p134 = scmp.eq.s32.totalorder %s16, 0
    %p135 = por %p133, %p134
    %p136 = scmp.ne.s32.totalorder %s122, %s123
    %p137 = scmp.eq.s32.totalorder %s17, 1
    %p138 = por %p136, %p137
    %p140 = scmp.ne.s32.totalorder %s123, %s139
    %p141 = scmp.eq.s32.totalorder %s17, 0
    %p142 = por %p140, %p141
    %s143 = ssub.s32 %s18, %s30
    %s144 = ssub.s32 %s19, %s26
    %s145 = sor.u32 %s143, %s144
    %p146 = scmp.eq.s32.totalorder %s145, 0
    %s148 = sadd.s32 %s147, 1
    %s149 = scalar_select %p146, %s147, %s148
    %p152 = pneg %p146
    %p153 = scmp.eq.s32.totalorder %s11, 1
    %p154 = por %p152, %p153
    %p155 = scmp.ne.s32.totalorder %s147, %s150
    %p156 = scmp.eq.s32.totalorder %s11, 0
    %p157 = por %p155, %p156
    %p158 = scmp.ne.s32.totalorder %s147, %s150
    %p159 = scmp.eq.s32.totalorder %s16, 1
    %p160 = por %p158, %p159
    %p161 = scmp.ne.s32.totalorder %s150, %s151
    %p162 = scmp.eq.s32.totalorder %s16, 0
    %p163 = por %p161, %p162
    %p164 = scmp.ne.s32.totalorder %s150, %s151
    %p165 = scmp.eq.s32.totalorder %s17, 1
    %p166 = por %p164, %p165
    %p168 = scmp.ne.s32.totalorder %s151, %s167
    %p169 = scmp.eq.s32.totalorder %s17, 0
    %p170 = por %p168, %p169
    %p171 = scmp.le.s32.totalorder 1, %s11
    %p172 = scmp.lt.s32.totalorder %s11, 3
    %p173 = pnand %p171, %p172
    %p174 = pneg %p173
    // Predicated region
    $region9: #{cross_entropy_loss_2d.1} parent=5 // pred_check
      _
    $region10: #{cross_entropy_loss_2d.1} parent=5 // pred_check_branch
      %176 = sbr.rel (%p173) target = $region12
    $region11: #{cross_entropy_loss_2d.1} parent=5 // pred_region
      %s177 = ssub.s32 %s11, 1
    $region12: #{cross_entropy_loss_2d.1} parent=5 // pred_fallthru
      _
    %p178 = scmp.lt.s32.totalorder %s11, 2
    // Predicated region
    $region13: #{cross_entropy_loss_2d.1} parent=5 // pred_check
      %p179 = pneg %p178
    $region14: #{cross_entropy_loss_2d.1} parent=5 // pred_check_branch
      %181 = sbr.rel (%p179) target = $region16
    $region15: #{cross_entropy_loss_2d.1} parent=5 // pred_region
      // Predicated region
      $region17: #{cross_entropy_loss_2d.1} parent=15 // pred_check
        %p182 = pneg %p45
      $region18: #{cross_entropy_loss_2d.1} parent=15 // pred_check_branch
        %184 = sbr.rel (%p182) target = $region20
      $region19: #{cross_entropy_loss_2d.1} parent=15 // pred_region
        %p185 = scmp.lt.s32.totalorder %s18, 1
        %s186 = scalar_select %p185, %s18, 1
        %p187 = scmp.lt.s32.totalorder %s19, 0
        %s188 = scalar_select %p187, %s19, 0
        %s189 = smul.addr %s186, 20
        %s190 = sadd.s32 %s188, %s189
        %s191 = smul.addr %s190, 2
        %s192 = scalar_lea.vmem %s0, %s191
      $region20: #{cross_entropy_loss_2d.1} parent=15 // pred_fallthru
        _
      // Predicated region
      $region21: #{cross_entropy_loss_2d.1} parent=15 // pred_check
        %p193 = pneg %p73
      $region22: #{cross_entropy_loss_2d.1} parent=15 // pred_check_branch
        %195 = sbr.rel (%p193) target = $region24
      $region23: #{cross_entropy_loss_2d.1} parent=15 // pred_region
        %p196 = scmp.lt.s32.totalorder %s18, 1
        %s197 = scalar_select %p196, %s18, 1
        %p198 = scmp.lt.s32.totalorder %s19, 0
        %s199 = scalar_select %p198, %s19, 0
        %s200 = sadd.s32 %s199, %s197
        %s201 = smul.addr %s200, 2
        %s202 = scalar_lea.vmem %s1, %s201
      $region24: #{cross_entropy_loss_2d.1} parent=15 // pred_fallthru
        _
      // Predicated region
      $region25: #{cross_entropy_loss_2d.1} parent=15 // pred_check
        %p203 = pneg %p101
      $region26: #{cross_entropy_loss_2d.1} parent=15 // pred_check_branch
        %205 = sbr.rel (%p203) target = $region28
      $region27: #{cross_entropy_loss_2d.1} parent=15 // pred_region
        %p206 = scmp.lt.s32.totalorder %s18, 1
        %s207 = scalar_select %p206, %s18, 1
        %p208 = scmp.lt.s32.totalorder %s19, 0
        %s209 = scalar_select %p208, %s19, 0
        %s210 = sadd.s32 %s209, %s207
        %s211 = smul.addr %s210, 2
        %s212 = scalar_lea.vmem %s2, %s211
      $region28: #{cross_entropy_loss_2d.1} parent=15 // pred_fallthru
        _
    $region16: #{cross_entropy_loss_2d.1} parent=5 // pred_fallthru
      _
    %p213 = scmp.le.s32.totalorder 1, %s11
    %p214 = scmp.lt.s32.totalorder %s11, 3
    %p215 = pnand %p213, %p214
    %p216 = pneg %p215
    // Predicated region
    $region29: #{cross_entropy_loss_2d.1} parent=5 // pred_check
      _
    $region30: #{cross_entropy_loss_2d.1} parent=5 // pred_check_branch
      %218 = sbr.rel (%p215) target = $region32
    $region31: #{cross_entropy_loss_2d.1} parent=5 // pred_region
      %s219 = ssub.s32 %s11, 1
      %p220 = scmp.lt.s32.totalorder %s20, 1
      %s221 = scalar_select %p220, %s20, 1
      %p222 = scmp.lt.s32.totalorder %s21, 0
      %s223 = scalar_select %p222, %s21, 0
      %s224 = smul.addr %s221, 20
      %s225 = sadd.s32 %s223, %s224
      %s226 = smul.addr %s225, 2
      %s227 = scalar_lea.vmem %s0, %s226
      %p228 = pneg %p51
      %p229 = pneg %p48
      %p230 = scmp.lt.s32.totalorder %s20, 1
      %s231 = scalar_select %p230, %s20, 1
      %p232 = scmp.lt.s32.totalorder %s21, 0
      %s233 = scalar_select %p232, %s21, 0
      %s234 = sadd.s32 %s233, %s231
      %s235 = smul.addr %s234, 2
      %s236 = scalar_lea.vmem %s1, %s235
      %p237 = pneg %p79
      %p238 = pneg %p76
      %p239 = scmp.lt.s32.totalorder %s20, 1
      %s240 = scalar_select %p239, %s20, 1
      %p241 = scmp.lt.s32.totalorder %s21, 0
      %s242 = scalar_select %p241, %s21, 0
      %s243 = sadd.s32 %s242, %s240
      %s244 = smul.addr %s243, 2
      %s245 = scalar_lea.vmem %s2, %s244
      %p246 = pneg %p107
      %p247 = pneg %p104
      %p248 = pneg %p135
      %p249 = pneg %p132
      %p250 = scmp.lt.s32.totalorder %s20, 1
      %s251 = scalar_select %p250, %s20, 1
      %p252 = scmp.lt.s32.totalorder %s21, 0
      %s253 = scalar_select %p252, %s21, 0
      %s254 = sadd.s32 %s253, %s251
      %s255 = scalar_lea.vmem %s3, %s254
      %p256 = pneg %p163
      %p257 = pneg %p160
      %p258 = scmp.lt.s32.totalorder %s20, 1
      %s259 = scalar_select %p258, %s20, 1
      %p260 = scmp.lt.s32.totalorder %s21, 0
      %s261 = scalar_select %p260, %s21, 0
      %s262 = sadd.s32 %s261, %s259
      %s263 = scalar_lea.vmem %s4, %s262
      %p264 = scmp.lt.s32.totalorder %s20, 1
      %s265 = scalar_select %p264, %s20, 1
      %p266 = scmp.lt.s32.totalorder %s21, 0
      %s267 = scalar_select %p266, %s21, 0
      %s268 = smul.addr %s265, 20
      %s269 = sadd.s32 %s267, %s268
      %s270 = smul.addr %s269, 2
      %s271 = scalar_lea.vmem %s0, %s270
      %p272 = scmp.lt.s32.totalorder %s20, 1
      %s273 = scalar_select %p272, %s20, 1
      %p274 = scmp.lt.s32.totalorder %s21, 0
      %s275 = scalar_select %p274, %s21, 0
      %s276 = sadd.s32 %s275, %s273
      %s277 = smul.addr %s276, 2
      %s278 = scalar_lea.vmem %s1, %s277
      %p279 = scmp.lt.s32.totalorder %s20, 1
      %s280 = scalar_select %p279, %s20, 1
      %p281 = scmp.lt.s32.totalorder %s21, 0
      %s282 = scalar_select %p281, %s21, 0
      %s283 = sadd.s32 %s282, %s280
      %s284 = smul.addr %s283, 2
      %s285 = scalar_lea.vmem %s2, %s284
      %p286 = scmp.lt.s32.totalorder %s20, 1
      %s287 = scalar_select %p286, %s20, 1
      %p288 = scmp.lt.s32.totalorder %s21, 0
      %s289 = scalar_select %p288, %s21, 0
      %s290 = sadd.s32 %s289, %s287
      %s291 = scalar_lea.vmem %s3, %s290
      %p292 = scmp.lt.s32.totalorder %s20, 1
      %s293 = scalar_select %p292, %s20, 1
      %p294 = scmp.lt.s32.totalorder %s21, 0
      %s295 = scalar_select %p294, %s21, 0
      %s296 = sadd.s32 %s295, %s293
      %s297 = scalar_lea.vmem %s4, %s296
      %298 = vst [vmem:[#allocation2] sm:$0x3] 0.0
      %299 = vst [vmem:[#allocation3] sm:$0x3] 0.0
      %v300 = vld [vmem:[%s278] sm:$0x3]
      %v301 = vld [vmem:[%s285] sm:$0x3]
      %v302 = vld [vmem:[%s271] sm:$0x3]
      %s303 = sadd.s32 0, 2
      %s304 = scalar_lea.vmem %s271, %s303
      %v305 = vld [vmem:[%s304] sm:$0x3]
      %v306 = vmax.f32 %v302, %v305
      %vm307 = vcmp.eq.s32.totalorder %v300, 1
      %v308 = vsel %vm307, %v305, %v302
      %s309 = sadd.s32 0, 4
      %s310 = scalar_lea.vmem %s271, %s309
      %v311 = vld [vmem:[%s310] sm:$0x3]
      %v312 = vmax.f32 %v306, %v311
      %vm313 = vcmp.eq.s32.totalorder %v300, 2
      %v314 = vsel %vm313, %v311, %v308
      %s315 = sadd.s32 0, 6
      %s316 = scalar_lea.vmem %s271, %s315
      %v317 = vld [vmem:[%s316] sm:$0x3]
      %v318 = vmax.f32 %v312, %v317
      %vm319 = vcmp.eq.s32.totalorder %v300, 3
      %v320 = vsel %vm319, %v317, %v314
      %s321 = sadd.s32 0, 8
      %s322 = scalar_lea.vmem %s271, %s321
      %v323 = vld [vmem:[%s322] sm:$0x3]
      %v324 = vmax.f32 %v318, %v323
      %vm325 = vcmp.eq.s32.totalorder %v300, 4
      %v326 = vsel %vm325, %v323, %v320
      %s327 = sadd.s32 0, 10
      %s328 = scalar_lea.vmem %s271, %s327
      %v329 = vld [vmem:[%s328] sm:$0x3]
      %v330 = vmax.f32 %v324, %v329
      %vm331 = vcmp.eq.s32.totalorder %v300, 5
      %v332 = vsel %vm331, %v329, %v326
      %s333 = sadd.s32 0, 12
      %s334 = scalar_lea.vmem %s271, %s333
      %v335 = vld [vmem:[%s334] sm:$0x3]
      %v336 = vmax.f32 %v330, %v335
      %vm337 = vcmp.eq.s32.totalorder %v300, 6
      %v338 = vsel %vm337, %v335, %v332
      %s339 = sadd.s32 0, 14
      %s340 = scalar_lea.vmem %s271, %s339
      %v341 = vld [vmem:[%s340] sm:$0x3]
      %v342 = vmax.f32 %v336, %v341
      %vm343 = vcmp.eq.s32.totalorder %v300, 7
      %v344 = vsel %vm343, %v341, %v338
      %s345 = sadd.s32 0, 16
      %s346 = scalar_lea.vmem %s271, %s345
      %v347 = vld [vmem:[%s346] sm:$0x3]
      %v348 = vmax.f32 %v342, %v347
      %vm349 = vcmp.eq.s32.totalorder %v300, 8
      %v350 = vsel %vm349, %v347, %v344
      %s351 = sadd.s32 0, 18
      %s352 = scalar_lea.vmem %s271, %s351
      %v353 = vld [vmem:[%s352] sm:$0x3]
      %v354 = vmax.f32 %v348, %v353
      %vm355 = vcmp.eq.s32.totalorder %v300, 9
      %v356 = vsel %vm355, %v353, %v350
      %s357 = sadd.s32 0, 20
      %s358 = scalar_lea.vmem %s271, %s357
      %v359 = vld [vmem:[%s358] sm:$0x3]
      %v360 = vmax.f32 %v354, %v359
      %vm361 = vcmp.eq.s32.totalorder %v300, 10
      %v362 = vsel %vm361, %v359, %v356
      %s363 = sadd.s32 0, 22
      %s364 = scalar_lea.vmem %s271, %s363
      %v365 = vld [vmem:[%s364] sm:$0x3]
      %v366 = vmax.f32 %v360, %v365
      %vm367 = vcmp.eq.s32.totalorder %v300, 11
      %v368 = vsel %vm367, %v365, %v362
      %s369 = sadd.s32 0, 24
      %s370 = scalar_lea.vmem %s271, %s369
      %v371 = vld [vmem:[%s370] sm:$0x3]
      %v372 = vmax.f32 %v366, %v371
      %vm373 = vcmp.eq.s32.totalorder %v300, 12
      %v374 = vsel %vm373, %v371, %v368
      %s375 = sadd.s32 0, 26
      %s376 = scalar_lea.vmem %s271, %s375
      %v377 = vld [vmem:[%s376] sm:$0x3]
      %v378 = vmax.f32 %v372, %v377
      %vm379 = vcmp.eq.s32.totalorder %v300, 13
      %v380 = vsel %vm379, %v377, %v374
      %s381 = sadd.s32 0, 28
      %s382 = scalar_lea.vmem %s271, %s381
      %v383 = vld [vmem:[%s382] sm:$0x3]
      %v384 = vmax.f32 %v378, %v383
      %vm385 = vcmp.eq.s32.totalorder %v300, 14
      %v386 = vsel %vm385, %v383, %v380
      %s387 = sadd.s32 0, 30
      %s388 = scalar_lea.vmem %s271, %s387
      %v389 = vld [vmem:[%s388] sm:$0x3]
      %v390 = vmax.f32 %v384, %v389
      %vm391 = vcmp.eq.s32.totalorder %v300, 15
      %v392 = vsel %vm391, %v389, %v386
      %s393 = sadd.s32 0, 32
      %s394 = scalar_lea.vmem %s271, %s393
      %v395 = vld [vmem:[%s394] sm:$0x3]
      %v396 = vmax.f32 %v390, %v395
      %vm397 = vcmp.eq.s32.totalorder %v300, 16
      %v398 = vsel %vm397, %v395, %v392
      %s399 = sadd.s32 0, 34
      %s400 = scalar_lea.vmem %s271, %s399
      %v401 = vld [vmem:[%s400] sm:$0x3]
      %v402 = vmax.f32 %v396, %v401
      %vm403 = vcmp.eq.s32.totalorder %v300, 17
      %v404 = vsel %vm403, %v401, %v398
      %s405 = sadd.s32 0, 36
      %s406 = scalar_lea.vmem %s271, %s405
      %v407 = vld [vmem:[%s406] sm:$0x3]
      %v408 = vmax.f32 %v402, %v407
      %vm409 = vcmp.eq.s32.totalorder %v300, 18
      %v410 = vsel %vm409, %v407, %v404
      %s411 = sadd.s32 0, 38
      %s412 = scalar_lea.vmem %s271, %s411
      %v413 = vld [vmem:[%s412] sm:$0x3]
      %v414 = vmax.f32 %v408, %v413
      %vm415 = vcmp.eq.s32.totalorder %v300, 19
      %v416 = vsel %vm415, %v413, %v410
      %v417 = vsub.f32 %v302, %v414
      %v418 = vmul.f32 %v417, 1.442695
      %v419 = vpow.pop %v418
      %v420 = vsub.f32 %v305, %v414
      %v421 = vmul.f32 %v420, 1.442695
      %v422 = vpow.pop %v421
      %v423 = vadd.f32 %v419, %v422
      %v424 = vsub.f32 %v311, %v414
      %v425 = vmul.f32 %v424, 1.442695
      %v426 = vpow.pop %v425
      %v427 = vadd.f32 %v423, %v426
      %v428 = vsub.f32 %v317, %v414
      %v429 = vmul.f32 %v428, 1.442695
      %v430 = vpow.pop %v429
      %v431 = vadd.f32 %v427, %v430
      %v432 = vsub.f32 %v323, %v414
      %v433 = vmul.f32 %v432, 1.442695
      %v434 = vpow.pop %v433
      %v435 = vadd.f32 %v431, %v434
      %v436 = vsub.f32 %v329, %v414
      %v437 = vmul.f32 %v436, 1.442695
      %v438 = vpow.pop %v437
      %v439 = vadd.f32 %v435, %v438
      %v440 = vsub.f32 %v335, %v414
      %v441 = vmul.f32 %v440, 1.442695
      %v442 = vpow.pop %v441
      %v443 = vadd.f32 %v439, %v442
      %v444 = vsub.f32 %v341, %v414
      %v445 = vmul.f32 %v444, 1.442695
      %v446 = vpow.pop %v445
      %v447 = vadd.f32 %v443, %v446
      %v448 = vsub.f32 %v347, %v414
      %v449 = vmul.f32 %v448, 1.442695
      %v450 = vpow.pop %v449
      %v451 = vadd.f32 %v447, %v450
      %v452 = vsub.f32 %v353, %v414
      %v453 = vmul.f32 %v452, 1.442695
      %v454 = vpow.pop %v453
      %v455 = vadd.f32 %v451, %v454
      %v456 = vsub.f32 %v359, %v414
      %v457 = vmul.f32 %v456, 1.442695
      %v458 = vpow.pop %v457
      %v459 = vadd.f32 %v455, %v458
      %v460 = vsub.f32 %v365, %v414
      %v461 = vmul.f32 %v460, 1.442695
      %v462 = vpow.pop %v461
      %v463 = vadd.f32 %v459, %v462
      %v464 = vsub.f32 %v371, %v414
      %v465 = vmul.f32 %v464, 1.442695
      %v466 = vpow.pop %v465
      %v467 = vadd.f32 %v463, %v466
      %v468 = vsub.f32 %v377, %v414
      %v469 = vmul.f32 %v468, 1.442695
      %v470 = vpow.pop %v469
      %v471 = vadd.f32 %v467, %v470
      %v472 = vsub.f32 %v383, %v414
      %v473 = vmul.f32 %v472, 1.442695
      %v474 = vpow.pop %v473
      %v475 = vadd.f32 %v471, %v474
      %v476 = vsub.f32 %v389, %v414
      %v477 = vmul.f32 %v476, 1.442695
      %v478 = vpow.pop %v477
      %v479 = vadd.f32 %v475, %v478
      %v480 = vsub.f32 %v395, %v414
      %v481 = vmul.f32 %v480, 1.442695
      %v482 = vpow.pop %v481
      %v483 = vadd.f32 %v479, %v482
      %v484 = vsub.f32 %v401, %v414
      %v485 = vmul.f32 %v484, 1.442695
      %v486 = vpow.pop %v485
      %v487 = vadd.f32 %v483, %v486
      %v488 = vsub.f32 %v407, %v414
      %v489 = vmul.f32 %v488, 1.442695
      %v490 = vpow.pop %v489
      %v491 = vadd.f32 %v487, %v490
      %v492 = vsub.f32 %v413, %v414
      %v493 = vmul.f32 %v492, 1.442695
      %v494 = vpow.pop %v493
      %v495 = vadd.f32 %v491, %v494
      %v496 = vsub.f32 %v416, %v414
      %v497 = vlog2.pop %v495
      %v498 = vmul.f32 %v497, 0.6931472
      %v499 = vsub.f32 %v496, %v498
      %v500 = vld [vmem:[#allocation2] sm:$0x3]
      %vm501 = vcmp.gt.f32.partialorder %v301, 0.0
      %v502 = vmul.f32 %v301, %v499
      %v503 = vsel %vm501, %v502, 0.0
      %v504 = vadd.f32 %v500, %v503
      %505 = vst [vmem:[#allocation2] sm:$0x3] %v504
      %v506 = vld [vmem:[#allocation3] sm:$0x3]
      %v507 = vadd.f32 %v506, %v301
      %508 = vst [vmem:[#allocation3] sm:$0x3] %v507
      %v509 = vld [vmem:[#allocation2] sm:$0x3]
      %vm510 = vcmask 1041408
      %v511 = vsel %vm510, %v509, 0.0
      %512 = vadd.xlane.f32.xlu0 %v511
      %v513 = vpop.xlane.xlu0 %512
      %v514 = vrot.slane %v513, 4
      %v515 = vadd.f32 %v513, %v514
      %v516 = vrot.slane %v515, 2
      %v517 = vadd.f32 %v515, %v516
      %v518 = vrot.slane %v517, 1
      %v519 = vadd.f32 %v517, %v518
      %s520 = vtos %v519
      %v521 = vstv %s520
      %vm522 = vcmask 0
      %523 = vst.msk [vmem:[%s291] sm:$0x1] %vm522, %v521
      %v524 = vld [vmem:[#allocation3] sm:$0x3]
      %v525 = vsel %vm510, %v524, 0.0
      %526 = vadd.xlane.f32.xlu0 %v525
      %v527 = vpop.xlane.xlu0 %526
      %v528 = vrot.slane %v527, 4
      %v529 = vadd.f32 %v527, %v528
      %v530 = vrot.slane %v529, 2
      %v531 = vadd.f32 %v529, %v530
      %v532 = vrot.slane %v531, 1
      %v533 = vadd.f32 %v531, %v532
      %s534 = vtos %v533
      %v535 = vstv %s534
      %536 = vst.msk [vmem:[%s297] sm:$0x1] %vm522, %v535
      %p537 = scmp.lt.s32.totalorder %s20, 1
      %s538 = scalar_select %p537, %s20, 1
      %p539 = scmp.lt.s32.totalorder %s21, 0
      %s540 = scalar_select %p539, %s21, 0
      %s541 = sadd.s32 %s540, %s538
      %s542 = scalar_lea.vmem %s3, %s541
      %p543 = scmp.lt.s32.totalorder %s20, 1
      %s544 = scalar_select %p543, %s20, 1
      %p545 = scmp.lt.s32.totalorder %s21, 0
      %s546 = scalar_select %p545, %s21, 0
      %s547 = sadd.s32 %s546, %s544
      %s548 = scalar_lea.vmem %s4, %s547
      // Predicated region
      $region33: #{cross_entropy_loss_2d.1} parent=31 // pred_check
        %p549 = pneg %p132
      $region34: #{cross_entropy_loss_2d.1} parent=31 // pred_check_branch
        %551 = sbr.rel (%p549) target = $region36
      $region35: #{cross_entropy_loss_2d.1} parent=31 // pred_region
        _
      $region36: #{cross_entropy_loss_2d.1} parent=31 // pred_fallthru
        _
      // Predicated region
      $region37: #{cross_entropy_loss_2d.1} parent=31 // pred_check
        %p552 = pneg %p160
      $region38: #{cross_entropy_loss_2d.1} parent=31 // pred_check_branch
        %554 = sbr.rel (%p552) target = $region40
      $region39: #{cross_entropy_loss_2d.1} parent=31 // pred_region
        _
      $region40: #{cross_entropy_loss_2d.1} parent=31 // pred_fallthru
        _
    $region32: #{cross_entropy_loss_2d.1} parent=5 // pred_fallthru
      _
    %p555 = scmp.le.s32.totalorder 2, %s11
    // Predicated region
    $region41: #{cross_entropy_loss_2d.1} parent=5 // pred_check
      %p556 = pneg %p555
    $region42: #{cross_entropy_loss_2d.1} parent=5 // pred_check_branch
      %558 = sbr.rel (%p556) target = $region44
    $region43: #{cross_entropy_loss_2d.1} parent=5 // pred_region
      %s559 = ssub.s32 %s11, 2
      // Predicated region
      $region45: #{cross_entropy_loss_2d.1} parent=43 // pred_check
        %p560 = pneg %p138
      $region46: #{cross_entropy_loss_2d.1} parent=43 // pred_check_branch
        %562 = sbr.rel (%p560) target = $region48
      $region47: #{cross_entropy_loss_2d.1} parent=43 // pred_region
        %p563 = scmp.lt.s32.totalorder %s22, 1
        %s564 = scalar_select %p563, %s22, 1
        %p565 = scmp.lt.s32.totalorder %s23, 0
        %s566 = scalar_select %p565, %s23, 0
        %s567 = sadd.s32 %s566, %s564
        %s568 = scalar_lea.vmem %s3, %s567
      $region48: #{cross_entropy_loss_2d.1} parent=43 // pred_fallthru
        _
      // Predicated region
      $region49: #{cross_entropy_loss_2d.1} parent=43 // pred_check
        %p569 = pneg %p166
      $region50: #{cross_entropy_loss_2d.1} parent=43 // pred_check_branch
        %571 = sbr.rel (%p569) target = $region52
      $region51: #{cross_entropy_loss_2d.1} parent=43 // pred_region
        %p572 = scmp.lt.s32.totalorder %s22, 1
        %s573 = scalar_select %p572, %s22, 1
        %p574 = scmp.lt.s32.totalorder %s23, 0
        %s575 = scalar_select %p574, %s23, 0
        %s576 = sadd.s32 %s575, %s573
        %s577 = scalar_lea.vmem %s4, %s576
      $region52: #{cross_entropy_loss_2d.1} parent=43 // pred_fallthru
        _
    $region44: #{cross_entropy_loss_2d.1} parent=5 // pred_fallthru
      _
  $region6: #{cross_entropy_loss_2d.1} parent=0 // loop_footer
    %s15 = sadd.s32 1, %s11
  $region7: #{cross_entropy_loss_2d.1} parent=0 // loop_footer_branch
    %10 = sbr.rel target = $region3
  $region8: #{cross_entropy_loss_2d.1} parent=0 // loop_exit
    _

</llo_original>
